<compile_context>
chip_gen: v7x
topology: tpu7x:2x2x1
jax: 0.10.0
libtpu: 0.0.40
codegen_flags: <defaults>
</compile_context>

<pallas_src>
import functools

import jax
import jax.numpy as jnp
from jax.experimental import pallas as pl
from jax.experimental.pallas import tpu as pltpu

_EPS = 1e-6  # matches torch.nn.functional.pairwise_distance default eps


def _round_up(x, m):
    return ((x + m - 1) // m) * m


def _triplet_loss_kernel(a_ref, p_ref, n_ref, out_ref, *, margin, batch, tile_b):
    i = pl.program_id(0)

    # Subtract in the wire dtype (bf16 VALU is native on v6e/v7x), upcast only the
    # two diffs, and add eps once per diff in f32.
    diff_pos = (a_ref[...] - p_ref[...]).astype(jnp.float32) + _EPS
    diff_neg = (a_ref[...] - n_ref[...]).astype(jnp.float32) + _EPS

    # Euclidean pairwise distance per row.
    d_pos = jnp.sqrt(jnp.sum(diff_pos * diff_pos, axis=-1, keepdims=True))  # (TB, 1)
    d_neg = jnp.sqrt(jnp.sum(diff_neg * diff_neg, axis=-1, keepdims=True))  # (TB, 1)

    losses = jnp.maximum(d_pos - d_neg + margin, 0.0)  # relu, (TB, 1)

    # Mask rows that fall past the true batch size (ragged / padded last tile).
    # Must be a select (where), not a multiply: padded block contents are undefined.
    row = jax.lax.broadcasted_iota(jnp.int32, losses.shape, 0)
    valid = (row + i * tile_b) < batch
    losses = jnp.where(valid, losses, 0.0)

    # One independent partial sum per grid step -> lane-dense (1, 8, 128) block.
    partial = jnp.sum(losses)
    out_ref[...] = jnp.broadcast_to(partial, out_ref.shape).astype(jnp.float32)


def triplet_loss(rep_anchor, rep_pos, rep_neg, triplet_margin=1.0, block_b=None):
    assert rep_anchor.shape == rep_pos.shape == rep_neg.shape
    assert rep_anchor.dtype == rep_pos.dtype == rep_neg.dtype
    B, D = rep_anchor.shape
    itemsize = jnp.dtype(rep_anchor.dtype).itemsize

    # dtype-aware sublane pack: 8 rows for f32, 16 for bf16, 32 for int8/fp8.
    pack = 8 * max(1, 4 // itemsize)

    # Derive the row-tile size from this generation's VMEM (v5e/v6e: 128 MiB,
    # v7x: 64 MiB), leaving ~half as headroom for the output blocks / compiler scratch.
    try:
        vmem_capacity = int(pltpu.get_tpu_info().vmem_capacity_bytes)
    except Exception:
        vmem_capacity = 64 << 20  # conservative (v7x) fallback
    budget = vmem_capacity // 2
    bytes_per_row = 3 * 2 * D * itemsize  # 3 input streams, double-buffered
    tb_cap = max(pack, (budget // bytes_per_row) // pack * pack)
    if block_b is not None:
        tb_cap = min(tb_cap, _round_up(int(block_b), pack))
    # Never tile past the (padded) batch; cap at 8192 rows to keep some pipelining /
    # megacore granularity for very small D.
    tb = max(pack, min(tb_cap, _round_up(B, pack), 8192))

    grid_b = pl.cdiv(B, tb)

    kernel = functools.partial(
        _triplet_loss_kernel,
        margin=float(triplet_margin),
        batch=B,
        tile_b=tb,
    )

    in_spec = pl.BlockSpec((tb, D), lambda i: (i, 0), memory_space=pltpu.VMEM)
    out_spec = pl.BlockSpec((1, 8, 128), lambda i: (i, 0, 0))

    # Raise the scoped VMEM limit to cover the double-buffered tiles (default is
    # only 16 MiB on v5e / 32 MiB on v6e/v7x).
    tile_bytes = 3 * 2 * tb * D * itemsize + 2 * (8 * 128 * 4)
    vmem_limit = min(vmem_capacity, max(tile_bytes + (4 << 20), 32 << 20))

    cost = pl.CostEstimate(
        flops=8 * B * D,                      # 2 sub + 2 add + 2 mul + 2 reduce-add /elem
        transcendentals=2 * B,                # two sqrt per row
        bytes_accessed=3 * B * D * itemsize + grid_b * 8 * 128 * 4,
    )

    partials = pl.pallas_call(
        kernel,
        out_shape=jax.ShapeDtypeStruct((grid_b, 8, 128), jnp.float32),
        grid=(grid_b,),
        in_specs=[in_spec, in_spec, in_spec],
        out_specs=out_spec,
        compiler_params=pltpu.CompilerParams(
            dimension_semantics=("parallel",),
            vmem_limit_bytes=int(vmem_limit),
        ),
        cost_estimate=cost,
    )(rep_anchor, rep_pos, rep_neg)

    # Finish the mean in plain JAX (also better summation accuracy for huge B).
    return jnp.sum(partials[:, 0, 0]) / jnp.float32(B)


def _reference_triplet_loss(a, p, n, margin=1.0):
    a = a.astype(jnp.float32)
    p = p.astype(jnp.float32)
    n = n.astype(jnp.float32)
    d_pos = jnp.sqrt(jnp.sum((a - p + _EPS) ** 2, axis=-1))
    d_neg = jnp.sqrt(jnp.sum((a - n + _EPS) ** 2, axis=-1))
    return jnp.mean(jnp.maximum(d_pos - d_neg + margin, 0.0))


if __name__ == "__main__":
    key = jax.random.PRNGKey(0)
    k_a, k_p, k_n = jax.random.split(key, 3)

    # Small sentence-embedding-like shapes; B=20 is deliberately not a multiple of 8
    # so the ragged-tile masking path is exercised.
    B, D = 20, 32
    rep_anchor = jax.random.normal(k_a, (B, D), dtype=jnp.float32)
    rep_pos = jax.random.normal(k_p, (B, D), dtype=jnp.float32)
    rep_neg = jax.random.normal(k_n, (B, D), dtype=jnp.float32)

    ref = _reference_triplet_loss(rep_anchor, rep_pos, rep_neg, margin=1.0)

    # Multi-tile path: TB=8 -> grid of 3 parallel steps, last tile ragged (rows 16..19).
    loss_tiled = triplet_loss(rep_anchor, rep_pos, rep_neg, triplet_margin=1.0, block_b=8)
    loss_tiled = jax.block_until_ready(loss_tiled)
    assert jnp.allclose(loss_tiled, ref, rtol=1e-5, atol=1e-5), (loss_tiled, ref)

    # Default path: VMEM-derived tile size -> single padded tile.
    loss_default = triplet_loss(rep_anchor, rep_pos, rep_neg, triplet_margin=1.0)
    loss_default = jax.block_until_ready(loss_default)
    assert jnp.allclose(loss_default, ref, rtol=1e-5, atol=1e-5), (loss_default, ref)

    # bf16 path: exercises the dtype-aware sublane pack (16) and the
    # subtract-in-wire-dtype / upcast-the-diff code path.
    a16 = rep_anchor.astype(jnp.bfloat16)
    p16 = rep_pos.astype(jnp.bfloat16)
    n16 = rep_neg.astype(jnp.bfloat16)
    ref16 = _reference_triplet_loss(a16, p16, n16, margin=1.0)
    loss_bf16 = triplet_loss(a16, p16, n16, triplet_margin=1.0)
    loss_bf16 = jax.block_until_ready(loss_bf16)
    assert jnp.allclose(loss_bf16, ref16, rtol=2e-2, atol=2e-2), (loss_bf16, ref16)

    print("KERNEL_OK")
</pallas_src>

<mosaic_0001>
module attributes {stable_mosaic.version = 11 : i64} {
  func.func @_triplet_loss_kernel(%arg0: i32, %arg1: memref<8x32xf32, #tpu.memory_space<vmem>>, %arg2: memref<8x32xf32, #tpu.memory_space<vmem>>, %arg3: memref<8x32xf32, #tpu.memory_space<vmem>>, %arg4: memref<1x8x128xf32, #tpu.memory_space<vmem>>) attributes {dimension_semantics = [#tpu.dimension_semantics<parallel>], iteration_bounds = array<i64: 3>, scalar_prefetch = 0 : i64, scratch_operands = 0 : i64, tpu.core_type = #tpu.core_type<tc>, window_params = [{transform_indices = @transform_0, window_bounds = array<i64: 8, 32>}, {transform_indices = @transform_1, window_bounds = array<i64: 8, 32>}, {transform_indices = @transform_2, window_bounds = array<i64: 8, 32>}, {transform_indices = @transform_3, window_bounds = array<i64: 1, 8, 128>}]} {
    %c0 = arith.constant 0 : index
    %c0_0 = arith.constant 0 : index
    %0 = vector.load %arg1[%c0, %c0_0] : memref<8x32xf32, #tpu.memory_space<vmem>>, vector<8x32xf32>
    %c0_1 = arith.constant 0 : index
    %c0_2 = arith.constant 0 : index
    %1 = vector.load %arg2[%c0_1, %c0_2] : memref<8x32xf32, #tpu.memory_space<vmem>>, vector<8x32xf32>
    %2 = arith.subf %0, %1 : vector<8x32xf32>
    %cst = arith.constant 9.99999997E-7 : f32
    %3 = vector.broadcast %cst : f32 to vector<8x32xf32>
    %4 = arith.addf %2, %3 : vector<8x32xf32>
    %c0_3 = arith.constant 0 : index
    %c0_4 = arith.constant 0 : index
    %5 = vector.load %arg1[%c0_3, %c0_4] : memref<8x32xf32, #tpu.memory_space<vmem>>, vector<8x32xf32>
    %c0_5 = arith.constant 0 : index
    %c0_6 = arith.constant 0 : index
    %6 = vector.load %arg3[%c0_5, %c0_6] : memref<8x32xf32, #tpu.memory_space<vmem>>, vector<8x32xf32>
    %7 = arith.subf %5, %6 : vector<8x32xf32>
    %cst_7 = arith.constant 9.99999997E-7 : f32
    %8 = vector.broadcast %cst_7 : f32 to vector<8x32xf32>
    %9 = arith.addf %7, %8 : vector<8x32xf32>
    %10 = arith.mulf %4, %4 : vector<8x32xf32>
    %cst_8 = arith.constant dense<0.000000e+00> : vector<8xf32>
    %11 = vector.multi_reduction <add>, %10, %cst_8 [1] : vector<8x32xf32> to vector<8xf32>
    %12 = vector.shape_cast %11 : vector<8xf32> to vector<8x1xf32>
    %13 = math.sqrt %12 : vector<8x1xf32>
    %14 = arith.mulf %9, %9 : vector<8x32xf32>
    %cst_9 = arith.constant dense<0.000000e+00> : vector<8xf32>
    %15 = vector.multi_reduction <add>, %14, %cst_9 [1] : vector<8x32xf32> to vector<8xf32>
    %16 = vector.shape_cast %15 : vector<8xf32> to vector<8x1xf32>
    %17 = math.sqrt %16 : vector<8x1xf32>
    %18 = arith.subf %13, %17 : vector<8x1xf32>
    %cst_10 = arith.constant 1.000000e+00 : f32
    %19 = vector.broadcast %cst_10 : f32 to vector<8x1xf32>
    %20 = arith.addf %18, %19 : vector<8x1xf32>
    %cst_11 = arith.constant 0.000000e+00 : f32
    %21 = vector.broadcast %cst_11 : f32 to vector<8x1xf32>
    %22 = arith.maximumf %20, %21 : vector<8x1xf32>
    %23 = tpu.iota {dimensions = array<i32: 0>} : vector<8x1xi32>
    %c8_i32 = arith.constant 8 : i32
    %24 = arith.muli %arg0, %c8_i32 : i32
    %25 = vector.broadcast %24 : i32 to vector<8x1xi32>
    %26 = arith.addi %23, %25 : vector<8x1xi32>
    %c20_i32 = arith.constant 20 : i32
    %27 = vector.broadcast %c20_i32 : i32 to vector<8x1xi32>
    %28 = arith.cmpi slt, %26, %27 : vector<8x1xi32>
    %cst_12 = arith.constant 0.000000e+00 : f32
    %29 = vector.broadcast %cst_12 : f32 to vector<8x1xf32>
    %30 = arith.select %28, %22, %29 : vector<8x1xi1>, vector<8x1xf32>
    %31 = vector.shape_cast %30 : vector<8x1xf32> to vector<1x8x1xf32>
    %cst_13 = arith.constant dense<0.000000e+00> : vector<1xf32>
    %32 = vector.multi_reduction <add>, %31, %cst_13 [1, 2] : vector<1x8x1xf32> to vector<1xf32>
    %33 = vector.shape_cast %32 : vector<1xf32> to vector<1x1x1xf32>
    %34 = vector.extract %33[0, 0, 0] : f32 from vector<1x1x1xf32>
    %35 = vector.broadcast %34 : f32 to vector<1x8x128xf32>
    %c0_14 = arith.constant 0 : index
    %c0_15 = arith.constant 0 : index
    %c0_16 = arith.constant 0 : index
    %36 = vector.load %arg4[%c0_14, %c0_15, %c0_16] : memref<1x8x128xf32, #tpu.memory_space<vmem>>, vector<1x8x128xf32>
    tpu.vector_store %arg4[%c0_14, %c0_15, %c0_16], %35 {strides = array<i32>} : memref<1x8x128xf32, #tpu.memory_space<vmem>>, vector<1x8x128xf32>,
    return
  }
  func.func @transform_0(%arg0: i32) -> (i32, i32) {
    %c0_i32 = arith.constant 0 : i32
    %c0_i32_0 = arith.constant 0 : i32
    return %arg0, %c0_i32 : i32, i32
  }
  func.func @transform_1(%arg0: i32) -> (i32, i32) {
    %c0_i32 = arith.constant 0 : i32
    %c0_i32_0 = arith.constant 0 : i32
    return %arg0, %c0_i32 : i32, i32
  }
  func.func @transform_2(%arg0: i32) -> (i32, i32) {
    %c0_i32 = arith.constant 0 : i32
    %c0_i32_0 = arith.constant 0 : i32
    return %arg0, %c0_i32 : i32, i32
  }
  func.func @transform_3(%arg0: i32) -> (i32, i32, i32) {
    %c0_i32 = arith.constant 0 : i32
    %c0_i32_0 = arith.constant 0 : i32
    %c0_i32_1 = arith.constant 0 : i32
    return %arg0, %c0_i32, %c0_i32_0 : i32, i32, i32
  }
}

</mosaic_0001>

<llo_original>
// kernel: tpu_custom_call.1
$region0: #{tpu_custom_call.1}
  #allocation0 [shape = 'u32[]', space=smem, size = 0x4, offset = 0x4, fixed_abs, tag = 'smem constant byte address 0x4 - core index']
  #allocation1 [shape = 'u32[144,128]{1,0:T(1,128)}', space=vmem, size = 0x12000, scoped, tag = 'internal scratch']
  %s0 = inlined_call_operand.hbm [shape: f32[20,32], index: 0, kind: input, shape index: {}]
  %s1 = inlined_call_operand.hbm [shape: f32[20,32], index: 1, kind: input, shape index: {}]
  %s2 = inlined_call_operand.hbm [shape: f32[20,32], index: 2, kind: input, shape index: {}]
  %s3 = inlined_call_operand.hbm [shape: f32[3,8,128], index: 3, kind: output, shape index: {}]
  %s4 = sld [smem:[#allocation0]]
  $region57: #{tpu_custom_call.1} parent=0
    _
  %s6 = ssub.s32 1, %s4
  %s7 = scalar_select 0, %s6, %s4
  $region1: #{tpu_custom_call.1} parent=0
    #allocation2 [shape = 'u8[8192]{0}', space=vmem, size = 0x2000, scoped, tag = 'input window, operand 0']
    #allocation3 [shape = 's32[2]{0}', space=sflag, size = 0x8, scoped, tag = 'scoped memory for tpu_custom_call.1']
    #allocation4 [shape = 's32[2]{0}', space=sflag, size = 0x8, scoped, tag = 'scoped memory for tpu_custom_call.1']
    #allocation5 [shape = 'u8[8192]{0}', space=vmem, size = 0x2000, scoped, tag = 'input window, operand 1']
    #allocation6 [shape = 's32[2]{0}', space=sflag, size = 0x8, scoped, tag = 'scoped memory for tpu_custom_call.1']
    #allocation7 [shape = 'u8[8192]{0}', space=vmem, size = 0x2000, scoped, tag = 'input window, operand 2']
    #allocation8 [shape = 'u8[8192]{0}', space=vmem, size = 0x2000, scoped, tag = 'output window, operand 0']
    %8 = vsyncpa [#allocation3], 0
    %s9 = scalar_lea.sflag [#allocation3], 1
    %10 = vsyncpa %s9, 0
    %11 = vsyncpa [#allocation6], 0
    %s12 = scalar_lea.sflag [#allocation6], 1
    %13 = vsyncpa %s12, 0
    %14 = vsyncpa [#allocation4], 0
    %s15 = scalar_lea.sflag [#allocation4], 1
    %16 = vsyncpa %s15, 0
    loop: start=0, step=1, limit=5
    $region2: #{tpu_custom_call.1} parent=1 // loop_pre_header
      _
    $region3: #{tpu_custom_call.1} parent=1 // loop_header
      %s18 = sphi 0, %s22
      %p19 = scmp.ge.s32.totalorder %s18, 5
      %s28 = sphi 0, %s30
      %s31 = sphi 0, %s28
      %s32 = sphi 0, %s31
      %s48 = sphi 0, %s32
      %s54 = sphi 0, %s56
      %s57 = sphi 0, %s54
      %s58 = sphi 0, %s57
      %s74 = sphi 0, %s58
      %s80 = sphi 0, %s82
      %s83 = sphi 0, %s80
      %s84 = sphi 0, %s83
      %s100 = sphi 0, %s84
      %s106 = sphi 0, %s108
      %s109 = sphi 0, %s106
      %s110 = sphi 0, %s109
      %s126 = sphi 0, %s110
    $region4: #{tpu_custom_call.1} parent=1 // loop_header_branch
      %21 = sbr.rel (%p19) target = $region8
    $region5: #{tpu_custom_call.1} parent=1 // loop_body
      %s23 = ssub.s32 %s18, 1
      %s24 = ssub.s32 %s18, 2
      %s25 = sadd.s32 %s18, 1
      %s26 = ssub.s32 %s18, %s25
      %p27 = scmp.eq.s32.totalorder %s26, 0
      %s29 = sadd.s32 %s28, 1
      %s30 = scalar_select %p27, %s28, %s29
      %p33 = pneg %p27
      %p34 = scmp.eq.s32.totalorder %s18, 2
      %p35 = por %p33, %p34
      %p36 = scmp.ne.s32.totalorder %s28, %s31
      %p37 = scmp.eq.s32.totalorder %s18, 0
      %p38 = por %p36, %p37
      %p39 = scmp.ne.s32.totalorder %s28, %s31
      %p40 = scmp.eq.s32.totalorder %s23, 2
      %p41 = por %p39, %p40
      %p42 = scmp.ne.s32.totalorder %s31, %s32
      %p43 = scmp.eq.s32.totalorder %s23, 0
      %p44 = por %p42, %p43
      %p45 = scmp.ne.s32.totalorder %s31, %s32
      %p46 = scmp.eq.s32.totalorder %s24, 2
      %p47 = por %p45, %p46
      %p49 = scmp.ne.s32.totalorder %s32, %s48
      %p50 = scmp.eq.s32.totalorder %s24, 0
      %p51 = por %p49, %p50
      %s52 = ssub.s32 %s18, %s25
      %p53 = scmp.eq.s32.totalorder %s52, 0
      %s55 = sadd.s32 %s54, 1
      %s56 = scalar_select %p53, %s54, %s55
      %p59 = pneg %p53
      %p60 = scmp.eq.s32.totalorder %s18, 2
      %p61 = por %p59, %p60
      %p62 = scmp.ne.s32.totalorder %s54, %s57
      %p63 = scmp.eq.s32.totalorder %s18, 0
      %p64 = por %p62, %p63
      %p65 = scmp.ne.s32.totalorder %s54, %s57
      %p66 = scmp.eq.s32.totalorder %s23, 2
      %p67 = por %p65, %p66
      %p68 = scmp.ne.s32.totalorder %s57, %s58
      %p69 = scmp.eq.s32.totalorder %s23, 0
      %p70 = por %p68, %p69
      %p71 = scmp.ne.s32.totalorder %s57, %s58
      %p72 = scmp.eq.s32.totalorder %s24, 2
      %p73 = por %p71, %p72
      %p75 = scmp.ne.s32.totalorder %s58, %s74
      %p76 = scmp.eq.s32.totalorder %s24, 0
      %p77 = por %p75, %p76
      %s78 = ssub.s32 %s18, %s25
      %p79 = scmp.eq.s32.totalorder %s78, 0
      %s81 = sadd.s32 %s80, 1
      %s82 = scalar_select %p79, %s80, %s81
      %p85 = pneg %p79
      %p86 = scmp.eq.s32.totalorder %s18, 2
      %p87 = por %p85, %p86
      %p88 = scmp.ne.s32.totalorder %s80, %s83
      %p89 = scmp.eq.s32.totalorder %s18, 0
      %p90 = por %p88, %p89
      %p91 = scmp.ne.s32.totalorder %s80, %s83
      %p92 = scmp.eq.s32.totalorder %s23, 2
      %p93 = por %p91, %p92
      %p94 = scmp.ne.s32.totalorder %s83, %s84
      %p95 = scmp.eq.s32.totalorder %s23, 0
      %p96 = por %p94, %p95
      %p97 = scmp.ne.s32.totalorder %s83, %s84
      %p98 = scmp.eq.s32.totalorder %s24, 2
      %p99 = por %p97, %p98
      %p101 = scmp.ne.s32.totalorder %s84, %s100
      %p102 = scmp.eq.s32.totalorder %s24, 0
      %p103 = por %p101, %p102
      %s104 = ssub.s32 %s18, %s25
      %p105 = scmp.eq.s32.totalorder %s104, 0
      %s107 = sadd.s32 %s106, 1
      %s108 = scalar_select %p105, %s106, %s107
      %p111 = pneg %p105
      %p112 = scmp.eq.s32.totalorder %s18, 2
      %p113 = por %p111, %p112
      %p114 = scmp.ne.s32.totalorder %s106, %s109
      %p115 = scmp.eq.s32.totalorder %s18, 0
      %p116 = por %p114, %p115
      %p117 = scmp.ne.s32.totalorder %s106, %s109
      %p118 = scmp.eq.s32.totalorder %s23, 2
      %p119 = por %p117, %p118
      %p120 = scmp.ne.s32.totalorder %s109, %s110
      %p121 = scmp.eq.s32.totalorder %s23, 0
      %p122 = por %p120, %p121
      %p123 = scmp.ne.s32.totalorder %s109, %s110
      %p124 = scmp.eq.s32.totalorder %s24, 2
      %p125 = por %p123, %p124
      %p127 = scmp.ne.s32.totalorder %s110, %s126
      %p128 = scmp.eq.s32.totalorder %s24, 0
      %p129 = por %p127, %p128
      %p130 = scmp.le.s32.totalorder 1, %s18
      %p131 = scmp.lt.s32.totalorder %s18, 4
      %p132 = pnand %p130, %p131
      %p133 = pneg %p132
      // Predicated region
      $region9: #{tpu_custom_call.1} parent=5 // pred_check
        _
      $region10: #{tpu_custom_call.1} parent=5 // pred_check_branch
        %135 = sbr.rel (%p132) target = $region12
      $region11: #{tpu_custom_call.1} parent=5 // pred_region
        %s136 = ssub.s32 %s18, 1
      $region12: #{tpu_custom_call.1} parent=5 // pred_fallthru
        _
      %p137 = scmp.lt.s32.totalorder %s18, 3
      // Predicated region
      $region13: #{tpu_custom_call.1} parent=5 // pred_check
        %p138 = pneg %p137
      $region14: #{tpu_custom_call.1} parent=5 // pred_check_branch
        %140 = sbr.rel (%p138) target = $region16
      $region15: #{tpu_custom_call.1} parent=5 // pred_region
        // Predicated region
        $region17: #{tpu_custom_call.1} parent=15 // pred_check
          %p141 = pneg %p38
        $region18: #{tpu_custom_call.1} parent=15 // pred_check_branch
          %143 = sbr.rel (%p141) target = $region20
        $region19: #{tpu_custom_call.1} parent=15 // pred_region
          %s144 = sand.u32 %s28, 1
          %s145 = scalar_lea.sflag [#allocation3], %s144
          %s146 = sand.u32 %s28, 1
          %s147 = smul.addr %s146, 8
          %s148 = scalar_lea.vmem [#allocation2], %s147
          %s150 = ssub.s32 128, 128
          %151 = vsyncadd %s145, %s150
          %s152 = smul.addr %s18, 128
          %s153 = scalar_lea.hbm %s0, %s152
          %s155 = sshll.u32 %s148, 4
          %s156 = int_to_ptr.vmem [resolvable:$true] %s155
          %158 = dma.hbm_to_vmem [thread:$0]  %s153, 128, %s156, %s145
        $region20: #{tpu_custom_call.1} parent=15 // pred_fallthru
          _
        // Predicated region
        $region21: #{tpu_custom_call.1} parent=15 // pred_check
          %p159 = pneg %p64
        $region22: #{tpu_custom_call.1} parent=15 // pred_check_branch
          %161 = sbr.rel (%p159) target = $region24
        $region23: #{tpu_custom_call.1} parent=15 // pred_region
          %s162 = sand.u32 %s18, 1
          %s163 = scalar_lea.sflag [#allocation6], %s162
          %s164 = sand.u32 %s54, 1
          %s165 = smul.addr %s164, 8
          %s166 = scalar_lea.vmem [#allocation5], %s165
          %s168 = ssub.s32 128, 128
          %169 = vsyncadd %s163, %s168
          %s170 = smul.addr %s18, 128
          %s171 = scalar_lea.hbm %s1, %s170
          %s173 = sshll.u32 %s166, 4
          %s174 = int_to_ptr.vmem [resolvable:$true] %s173
          %176 = dma.hbm_to_vmem [thread:$0]  %s171, 128, %s174, %s163
        $region24: #{tpu_custom_call.1} parent=15 // pred_fallthru
          _
        // Predicated region
        $region25: #{tpu_custom_call.1} parent=15 // pred_check
          %p177 = pneg %p90
        $region26: #{tpu_custom_call.1} parent=15 // pred_check_branch
          %179 = sbr.rel (%p177) target = $region28
        $region27: #{tpu_custom_call.1} parent=15 // pred_region
          %s180 = sand.u32 %s18, 1
          %s181 = scalar_lea.sflag [#allocation6], %s180
          %s182 = sand.u32 %s80, 1
          %s183 = smul.addr %s182, 8
          %s184 = scalar_lea.vmem [#allocation7], %s183
          %s186 = ssub.s32 128, 128
          %187 = vsyncadd %s181, %s186
          %s188 = smul.addr %s18, 128
          %s189 = scalar_lea.hbm %s2, %s188
          %s191 = sshll.u32 %s184, 4
          %s192 = int_to_ptr.vmem [resolvable:$true] %s191
          %194 = dma.hbm_to_vmem [thread:$0]  %s189, 128, %s192, %s181
        $region28: #{tpu_custom_call.1} parent=15 // pred_fallthru
          _
      $region16: #{tpu_custom_call.1} parent=5 // pred_fallthru
        _
      %p195 = scmp.le.s32.totalorder 1, %s18
      %p196 = scmp.lt.s32.totalorder %s18, 4
      %p197 = pnand %p195, %p196
      %p198 = pneg %p197
      // Predicated region
      $region29: #{tpu_custom_call.1} parent=5 // pred_check
        _
      $region30: #{tpu_custom_call.1} parent=5 // pred_check_branch
        %200 = sbr.rel (%p197) target = $region32
      $region31: #{tpu_custom_call.1} parent=5 // pred_region
        %s201 = ssub.s32 %s18, 1
        %s202 = sand.u32 %s31, 1
        %s203 = scalar_lea.sflag [#allocation3], %s202
        %s204 = sand.u32 %s31, 1
        %s205 = smul.addr %s204, 8
        %s206 = scalar_lea.vmem [#allocation2], %s205
        // Predicated region
        $region33: #{tpu_custom_call.1} parent=31 // pred_check
          %p207 = pneg %p44
        $region34: #{tpu_custom_call.1} parent=31 // pred_check_branch
          %209 = sbr.rel (%p207) target = $region36
        $region35: #{tpu_custom_call.1} parent=31 // pred_region
          %210 = dma.done %s203, 128
        $region36: #{tpu_custom_call.1} parent=31 // pred_fallthru
          _
        %s211 = sand.u32 %s23, 1
        %s212 = scalar_lea.sflag [#allocation6], %s211
        %s213 = sand.u32 %s57, 1
        %s214 = smul.addr %s213, 8
        %s215 = scalar_lea.vmem [#allocation5], %s214
        // Predicated region
        $region37: #{tpu_custom_call.1} parent=31 // pred_check
          %p216 = pneg %p70
        $region38: #{tpu_custom_call.1} parent=31 // pred_check_branch
          %218 = sbr.rel (%p216) target = $region40
        $region39: #{tpu_custom_call.1} parent=31 // pred_region
          %219 = dma.done %s212, 128
        $region40: #{tpu_custom_call.1} parent=31 // pred_fallthru
          _
        %s220 = sand.u32 %s23, 1
        %s221 = scalar_lea.sflag [#allocation6], %s220
        %s222 = sand.u32 %s83, 1
        %s223 = smul.addr %s222, 8
        %s224 = scalar_lea.vmem [#allocation7], %s223
        // Predicated region
        $region41: #{tpu_custom_call.1} parent=31 // pred_check
          %p225 = pneg %p96
        $region42: #{tpu_custom_call.1} parent=31 // pred_check_branch
          %227 = sbr.rel (%p225) target = $region44
        $region43: #{tpu_custom_call.1} parent=31 // pred_region
          %228 = dma.done %s221, 128
        $region44: #{tpu_custom_call.1} parent=31 // pred_fallthru
          _
        %s229 = sand.u32 %s31, 1
        %s230 = scalar_lea.sflag [#allocation3], %s229
        %s231 = sand.u32 %s31, 1
        %s232 = smul.addr %s231, 8
        %s233 = scalar_lea.vmem [#allocation2], %s232
        %p234 = pneg %p44
        %p235 = pneg %p41
        %s236 = sand.u32 %s23, 1
        %s237 = scalar_lea.sflag [#allocation6], %s236
        %s238 = sand.u32 %s57, 1
        %s239 = smul.addr %s238, 8
        %s240 = scalar_lea.vmem [#allocation5], %s239
        %p241 = pneg %p70
        %p242 = pneg %p67
        %s243 = sand.u32 %s23, 1
        %s244 = scalar_lea.sflag [#allocation6], %s243
        %s245 = sand.u32 %s83, 1
        %s246 = smul.addr %s245, 8
        %s247 = scalar_lea.vmem [#allocation7], %s246
        %p248 = pneg %p96
        %p249 = pneg %p93
        %p250 = pneg %p122
        %p251 = pneg %p119
        %s252 = sand.u32 %s109, 1
        %s253 = scalar_lea.sflag [#allocation4], %s252
        %s254 = sand.u32 %s109, 1
        %s255 = smul.addr %s254, 8
        %s256 = scalar_lea.vmem [#allocation8], %s255
        %v257 = vld [vmem:[%s206] sm:$0xff]
        %v258 = vld [vmem:[%s215] sm:$0xff]
        %v259 = vsub.f32 %v257, %v258
        %v260 = vadd.f32 %v259, 1e-06
        %v261 = vld [vmem:[%s224] sm:$0xff]
        %v262 = vsub.f32 %v257, %v261
        %v263 = vadd.f32 %v262, 1e-06
        %v264 = vmul.f32 %v260, %v260
        %vm265 = vcmask 261120
        %v266 = vsel %vm265, %v264, 0.0
        %267 = vadd.xlane.f32.xlu0 %v266
        %v268 = vpop.xlane.xlu0 %267
        %v269 = vrsqrt.pop %v268
        %v270 = vmul.f32 %v268, %v269
        %vm271 = vcmp.eq.f32.partialorder %v268, inf
        %v272 = vsel %vm271, %v268, %v270
        %vm273 = vcmp.eq.f32.partialorder %v268, 0.0
        %v274 = vand.u32 %v268, 2147483648
        %v275 = vsel %vm273, %v274, %v272
        %v276 = vmul.f32 %v263, %v263
        %v277 = vsel %vm265, %v276, 0.0
        %278 = vadd.xlane.f32.xlu0 %v277
        %v279 = vpop.xlane.xlu0 %278
        %v280 = vrsqrt.pop %v279
        %v281 = vmul.f32 %v279, %v280
        %vm282 = vcmp.eq.f32.partialorder %v279, inf
        %v283 = vsel %vm282, %v279, %v281
        %vm284 = vcmp.eq.f32.partialorder %v279, 0.0
        %v285 = vand.u32 %v279, 2147483648
        %v286 = vsel %vm284, %v285, %v283
        %v287 = vsub.f32 %v275, %v286
        %v288 = vadd.f32 %v287, 1.0
        %v289 = vmax.f32 %v288, 0.0
        %v290 = vlaneseq
        %v291 = vshrl.u32 %v290, 7
        %s292 = smul.u32 %s23, 8
        %v293 = vstv %s292
        %v294 = vadd.s32 %v291, %v293
        %vm295 = vcmp.lt.s32.totalorder %v294, 20
        %v296 = vsel %vm295, %v289, 0.0
        %vm297 = vcmask 7168
        %v298 = vsel %vm297, %v296, 0.0
        %299 = vadd.xlane.f32.xlu0 %v298
        %v300 = vpop.xlane.xlu0 %299
        %v301 = vrot.slane %v300, 4
        %v302 = vadd.f32 %v300, %v301
        %v303 = vrot.slane %v302, 2
        %v304 = vadd.f32 %v302, %v303
        %v305 = vrot.slane %v304, 1
        %v306 = vadd.f32 %v304, %v305
        %s307 = vtos %v306
        %v308 = vstv %s307
        %309 = vst [vmem:[%s256] sm:$0xff] %v308
        %s310 = sand.u32 %s109, 1
        %s311 = scalar_lea.sflag [#allocation4], %s310
        %s312 = sand.u32 %s109, 1
        %s313 = smul.addr %s312, 8
        %s314 = scalar_lea.vmem [#allocation8], %s313
        // Predicated region
        $region45: #{tpu_custom_call.1} parent=31 // pred_check
          %p315 = pneg %p119
        $region46: #{tpu_custom_call.1} parent=31 // pred_check_branch
          %317 = sbr.rel (%p315) target = $region48
        $region47: #{tpu_custom_call.1} parent=31 // pred_region
          %s319 = ssub.s32 128, 128
          %320 = vsyncadd %s311, %s319
          %s321 = smul.addr %s23, 128
          %s322 = scalar_lea.hbm %s3, %s321
          %s324 = sshll.u32 %s314, 4
          %s325 = int_to_ptr.vmem [resolvable:$true] %s324
          %327 = dma.vmem_to_hbm [thread:$0]  %s325, 128, %s322, %s311
        $region48: #{tpu_custom_call.1} parent=31 // pred_fallthru
          _
      $region32: #{tpu_custom_call.1} parent=5 // pred_fallthru
        _
      %p328 = scmp.le.s32.totalorder 2, %s18
      // Predicated region
      $region49: #{tpu_custom_call.1} parent=5 // pred_check
        %p329 = pneg %p328
      $region50: #{tpu_custom_call.1} parent=5 // pred_check_branch
        %331 = sbr.rel (%p329) target = $region52
      $region51: #{tpu_custom_call.1} parent=5 // pred_region
        %s332 = ssub.s32 %s18, 2
        // Predicated region
        $region53: #{tpu_custom_call.1} parent=51 // pred_check
          %p333 = pneg %p125
        $region54: #{tpu_custom_call.1} parent=51 // pred_check_branch
          %335 = sbr.rel (%p333) target = $region56
        $region55: #{tpu_custom_call.1} parent=51 // pred_region
          %s336 = sand.u32 %s110, 1
          %s337 = scalar_lea.sflag [#allocation4], %s336
          %s338 = sand.u32 %s110, 1
          %s339 = smul.addr %s338, 8
          %s340 = scalar_lea.vmem [#allocation8], %s339
          %341 = dma.done %s337, 128
        $region56: #{tpu_custom_call.1} parent=51 // pred_fallthru
          _
      $region52: #{tpu_custom_call.1} parent=5 // pred_fallthru
        _
    $region6: #{tpu_custom_call.1} parent=1 // loop_footer
      %s22 = sadd.s32 1, %s18
    $region7: #{tpu_custom_call.1} parent=1 // loop_footer_branch
      %17 = sbr.rel target = $region3
    $region8: #{tpu_custom_call.1} parent=1 // loop_exit
      _
    %342 = vsyncpa [#allocation3], 1
    %s343 = scalar_lea.sflag [#allocation3], 1
    %344 = vsyncpa %s343, 1
    %345 = vsyncpa [#allocation6], 1
    %s346 = scalar_lea.sflag [#allocation6], 1
    %347 = vsyncpa %s346, 1
    %348 = vsyncpa [#allocation4], 1
    %s349 = scalar_lea.sflag [#allocation4], 1
    %350 = vsyncpa %s349, 1

</llo_original>
